<compile_context>
chip_gen: v5e
topology: v5e:2x2
jax: 0.10.0
libtpu: 0.0.40
codegen_flags: <defaults>
</compile_context>

<pallas_src>
import jax
import jax.numpy as jnp
from jax.experimental import pallas as pl
from jax.experimental.pallas import tpu as pltpu


NUM_IDS = 8     # number of subject ids held in the ParameterDict
ETA_DIM = 128   # length of each eta parameter vector (lane-aligned)


def _eta_gather_kernel(ids_ref, table_ref, out_ref):
    # ids_ref:   VMEM (TB, 1)       int32  -- subject ids for this batch tile
    # table_ref: VMEM (NUM_IDS, ED) f32    -- full eta table (VMEM-resident, untiled)
    # out_ref:   VMEM (TB, ED)      f32
    num_ids = table_ref.shape[0]
    tb = out_ref.shape[0]

    # Fold the OOB guard into the kernel (VPU clip is free; keeps the guard
    # adjacent to the access it protects).  Note: clamping diverges from
    # torchpm's ParameterDict KeyError semantics for unknown ids.
    ids = jnp.clip(ids_ref[...], 0, num_ids - 1)                     # (TB, 1)

    # One-hot gather on the MXU: (TB, NUM_IDS) @ (NUM_IDS, ETA_DIM).
    row_iota = jax.lax.broadcasted_iota(jnp.int32, (tb, num_ids), 1)  # (TB, NUM_IDS)
    onehot = (ids == row_iota).astype(table_ref.dtype)
    out_ref[...] = jnp.dot(
        onehot, table_ref[...], preferred_element_type=jnp.float32
    ).astype(out_ref.dtype)


def _eta_gather(table, ids, *, max_block_b=128):
    """Gather rows `ids` from `table`. table: (num_ids, eta_dim), ids: (B,) int."""
    num_ids, eta_dim = table.shape
    batch = ids.shape[0]

    # Sublane-dense batch tile: multiple of 8, capped at max_block_b.
    tb = min(max_block_b, pl.cdiv(batch, 8) * 8)
    b_pad = pl.cdiv(batch, tb) * tb

    # Pad ids to the tile grid; padded rows gather row 0 and are sliced away.
    ids2 = jnp.zeros((b_pad, 1), jnp.int32).at[:batch, 0].set(ids.astype(jnp.int32))

    out = pl.pallas_call(
        _eta_gather_kernel,
        out_shape=jax.ShapeDtypeStruct((b_pad, eta_dim), table.dtype),
        grid_spec=pltpu.PrefetchScalarGridSpec(
            num_scalar_prefetch=0,
            grid=(b_pad // tb,),
            in_specs=[
                # ids tile for this grid step (last dim == full array dim -> legal).
                pl.BlockSpec((tb, 1), lambda i: (i, 0)),
                # Full table, VMEM-resident across all steps (4 KiB — trivially fits
                # every generation's VMEM, incl. v7x's 64 MiB).
                pl.BlockSpec((num_ids, eta_dim), lambda i: (0, 0)),
            ],
            out_specs=pl.BlockSpec((tb, eta_dim), lambda i: (i, 0)),
        ),
        compiler_params=pltpu.CompilerParams(
            # Independent output tiles -> shard across both TCs on v7x.
            dimension_semantics=("parallel",)),
    )(ids2, table)
    return out[:batch]


class Eta:
    """JAX/Pallas analogue of torchpm.parameter.Eta."""

    def __init__(self, key, num_ids: int = NUM_IDS, eta_dim: int = ETA_DIM):
        # Deterministic synthetic initialization of the ParameterDict
        # (torchpm fills these with per-subject random-effect estimates).
        self.table = 0.1 * jax.random.normal(
            key, (num_ids, eta_dim), dtype=jnp.float32
        )
        self.id = 0  # current subject id (set externally in torchpm)
        self._gather = jax.jit(_eta_gather)

    def lookup(self, ids):
        """Batched lookup: ids (B,) int -> (B, eta_dim)."""
        ids = jnp.asarray(ids, dtype=jnp.int32)
        return self._gather(self.table, ids)

    def forward(self, ids=None):
        # Original torchpm semantics: no argument -> return the parameter
        # vector for the module's current `id`, shape (eta_dim,).
        if ids is None:
            return self.lookup(jnp.array([self.id], dtype=jnp.int32))[0]
        # Batched fast path (amortizes launch cost across subjects).
        return self.lookup(ids)


if __name__ == "__main__":
    key = jax.random.PRNGKey(0)
    eta = Eta(key, num_ids=NUM_IDS, eta_dim=ETA_DIM)

    # --- single-id forward, matching the PyTorch module's semantics ---------
    eta.id = 3
    single = jax.block_until_ready(eta.forward())
    assert single.shape == (ETA_DIM,)
    assert single.dtype == jnp.float32
    assert bool(jnp.allclose(single, eta.table[eta.id])), "Eta forward mismatch"

    # --- batched lookup path -------------------------------------------------
    ids = jnp.array([1, 5, 0, 7], dtype=jnp.int32)
    batched = jax.block_until_ready(eta.forward(ids))
    assert batched.shape == (ids.shape[0], ETA_DIM)
    expected = eta.table[ids]
    assert bool(jnp.allclose(batched, expected)), "Eta batched lookup mismatch"

    # --- larger batch to exercise multi-tile ("parallel") grid path ---------
    key2 = jax.random.PRNGKey(1)
    big_ids = jax.random.randint(key2, (300,), 0, NUM_IDS, dtype=jnp.int32)
    big = jax.block_until_ready(eta.forward(big_ids))
    assert big.shape == (300, ETA_DIM)
    assert bool(jnp.allclose(big, eta.table[big_ids])), "Eta large-batch mismatch"

    print("KERNEL_OK")
</pallas_src>

<mosaic_0001>
module attributes {stable_mosaic.version = 11 : i64} {
  func.func @_eta_gather_kernel(%arg0: i32, %arg1: memref<8x1xi32, #tpu.memory_space<vmem>>, %arg2: memref<8x128xf32, #tpu.memory_space<vmem>>, %arg3: memref<8x128xf32, #tpu.memory_space<vmem>>) attributes {dimension_semantics = [#tpu.dimension_semantics<parallel>], iteration_bounds = array<i64: 1>, scalar_prefetch = 0 : i64, scratch_operands = 0 : i64, tpu.core_type = #tpu.core_type<tc>, window_params = [{transform_indices = @transform_0, window_bounds = array<i64: 8, 1>}, {pipeline_mode = #tpu.pipeline_mode<synchronous>, transform_indices = @transform_1, window_bounds = array<i64: 8, 128>}, {transform_indices = @transform_2, window_bounds = array<i64: 8, 128>}]} {
    %c0 = arith.constant 0 : index
    %c0_0 = arith.constant 0 : index
    %0 = vector.load %arg1[%c0, %c0_0] : memref<8x1xi32, #tpu.memory_space<vmem>>, vector<8x1xi32>
    %c0_i32 = arith.constant 0 : i32
    %c7_i32 = arith.constant 7 : i32
    %1 = vector.broadcast %c0_i32 : i32 to vector<8x1xi32>
    %2 = arith.maxsi %1, %0 : vector<8x1xi32>
    %3 = vector.broadcast %c7_i32 : i32 to vector<8x1xi32>
    %4 = arith.minsi %3, %2 : vector<8x1xi32>
    %5 = tpu.iota {dimensions = array<i32: 1>} : vector<8x8xi32>
    %6 = vector.broadcast %4 : vector<8x1xi32> to vector<8x8xi32>
    %7 = arith.cmpi eq, %6, %5 : vector<8x8xi32>
    %8 = arith.extui %7 : vector<8x8xi1> to vector<8x8xi32>
    %9 = arith.sitofp %8 : vector<8x8xi32> to vector<8x8xf32>
    %c0_1 = arith.constant 0 : index
    %c0_2 = arith.constant 0 : index
    %10 = vector.load %arg2[%c0_1, %c0_2] : memref<8x128xf32, #tpu.memory_space<vmem>>, vector<8x128xf32>
    %cst = arith.constant dense<0.000000e+00> : vector<8x128xf32>
    %11 = tpu.matmul %9, %10, %cst {dimension_numbers = #tpu.dot_dimension_numbers<[1], [0], [0], [1], [0, 0, 1, 1], [], []>} : vector<8x8xf32>, vector<8x128xf32>, vector<8x128xf32> -> vector<8x128xf32>
    %c0_3 = arith.constant 0 : index
    %c0_4 = arith.constant 0 : index
    %12 = vector.load %arg3[%c0_3, %c0_4] : memref<8x128xf32, #tpu.memory_space<vmem>>, vector<8x128xf32>
    tpu.vector_store %arg3[%c0_3, %c0_4], %11 {strides = array<i32>} : memref<8x128xf32, #tpu.memory_space<vmem>>, vector<8x128xf32>,
    return
  }
  func.func @transform_0(%arg0: i32) -> (i32, i32) {
    %c0_i32 = arith.constant 0 : i32
    %c0_i32_0 = arith.constant 0 : i32
    return %arg0, %c0_i32 : i32, i32
  }
  func.func @transform_1(%arg0: i32) -> (i32, i32) {
    %c0_i32 = arith.constant 0 : i32
    %c0_i32_0 = arith.constant 0 : i32
    %c0_i32_1 = arith.constant 0 : i32
    return %c0_i32, %c0_i32_0 : i32, i32
  }
  func.func @transform_2(%arg0: i32) -> (i32, i32) {
    %c0_i32 = arith.constant 0 : i32
    %c0_i32_0 = arith.constant 0 : i32
    return %arg0, %c0_i32 : i32, i32
  }
}

</mosaic_0001>

<llo_original>
// kernel: _eta_gather.1
$region0: #{_eta_gather.1}
  #allocation0 [shape = 'u32[]', space=smem, size = 0x4, offset = 0x4, fixed_abs, tag = 'smem constant byte address 0x4 - core index']
  #allocation1 [shape = 'u32[72,128]{1,0:T(1,128)}', space=vmem, size = 0x9000, scoped, tag = 'internal scratch']
  %s0 = inlined_call_operand.vmem [shape: s32[8,1], index: 0, kind: input, shape index: {}]
  %s1 = inlined_call_operand.vmem [shape: f32[8,128], index: 1, kind: input, shape index: {}]
  %s2 = inlined_call_operand.vmem [shape: f32[8,128], index: 2, kind: output, shape index: {}]
  %s3 = sld [smem:[#allocation0]]
  $region18: #{_eta_gather.1} parent=0
    _
  %s5 = ssub.s32 1, %s3
  %s6 = scalar_select 0, %s5, %s3
  // Predicated region
  $region2: #{_eta_gather.1} parent=0 // pred_check
    _
  $region3: #{_eta_gather.1} parent=0 // pred_check_branch
    %8 = sbr.rel (0) target = $region5
  $region4: #{_eta_gather.1} parent=0 // pred_region
    _
  $region5: #{_eta_gather.1} parent=0 // pred_fallthru
    _
  // Predicated region
  $region6: #{_eta_gather.1} parent=0 // pred_check
    _
  $region7: #{_eta_gather.1} parent=0 // pred_check_branch
    %10 = sbr.rel (0) target = $region9
  $region8: #{_eta_gather.1} parent=0 // pred_region
    _
  $region9: #{_eta_gather.1} parent=0 // pred_fallthru
    _
  %v11 = vld [vmem:[%s0] sm:$0xff]
  %vm12 = vcmp.gt.s32.totalorder %v11, 0
  %v13 = vsel %vm12, %v11, 0
  %vm14 = vcmp.lt.s32.totalorder %v13, 7
  %v15 = vsel %vm14, %v13, 7
  %v16 = vlaneseq
  %v17 = vand.u32 %v16, 127
  %18 = vset.pattern.permute.xlu0 0
  %19 = vperm.xlu0 %18, %v15
  %v20 = vpop.permute.xlu0 %19
  %vm21 = vcmp.eq.s32.totalorder %v20, %v17
  %v22 = vsel %vm21, 1, 0
  %v23 = vcvt.s32.f32 %v22
  %v24 = vld [vmem:[%s1] sm:$0xff]
  %vm25 = vcmask 64512
  %v27 = vsel %vm25, %v23, 0
  %29 = vmatpush.msra.mxu0 0.0
  %30 = vmatpush.msra.mxu0 0.0
  %31 = vmatpush.msra.mxu0 0.0
  %32 = vmatpush.msra.mxu0 0.0
  %33 = vmatpush.msra.mxu0 0.0
  %34 = vmatpush.msra.mxu0 0.0
  %35 = vmatpush.msra.mxu0 0.0
  %36 = vmatpush.msra.mxu0 0.0
  %37 = vmatpush.msra.mxu0 0.0
  %38 = vmatpush.msra.mxu0 0.0
  %39 = vmatpush.msra.mxu0 0.0
  %40 = vmatpush.msra.mxu0 0.0
  %41 = vmatpush.msra.mxu0 0.0
  %42 = vmatpush.msra.mxu0 0.0
  %43 = vmatpush.msra.mxu0 0.0
  %44 = vmatpush.msra.mxu0 %v24
  %45 = vmatmul.f32.gmra.mxu0 %v27
  %v46 = vpop.f32.mrf.mxu0
  %v47 = vadd.f32 0.0, %v46
  %48 = vdwg.mxu0
  %49 = vst [vmem:[%s2] sm:$0xff] %v47
  // Predicated region
  $region10: #{_eta_gather.1} parent=0 // pred_check
    _
  $region11: #{_eta_gather.1} parent=0 // pred_check_branch
    %51 = sbr.rel (0) target = $region13
  $region12: #{_eta_gather.1} parent=0 // pred_region
    _
  $region13: #{_eta_gather.1} parent=0 // pred_fallthru
    _
  // Predicated region
  $region14: #{_eta_gather.1} parent=0 // pred_check
    _
  $region15: #{_eta_gather.1} parent=0 // pred_check_branch
    %53 = sbr.rel (0) target = $region17
  $region16: #{_eta_gather.1} parent=0 // pred_region
    _
  $region17: #{_eta_gather.1} parent=0 // pred_fallthru
    _

</llo_original>
